<compile_context>
chip_gen: v7x
topology: tpu7x:2x2x1
jax: 0.10.0
libtpu: 0.0.40
codegen_flags: <defaults>
</compile_context>

<pallas_src>
import functools

import jax
import jax.numpy as jnp
from jax.experimental import pallas as pl
from jax.experimental.pallas import tpu as pltpu

# ----------------------- small config consistent with the module -----------
B = 8                     # batch (tokens)
IN_DIM = 32               # in_dim
OUT_DIM = 8               # out_dim
NUM_EXPERT = 16           # num_expert
NUM_MOD = 2               # num_mod
K = 12                    # top-k
HIDDEN = IN_DIM // 4      # MoE expert hidden size
EH = NUM_EXPERT * HIDDEN  # 128 -- flattened (expert, hidden) contraction dim


def _vmem():
    # whole-array block resident in VMEM (all operands are tiny; no grid)
    return pl.BlockSpec(memory_space=pltpu.MemorySpace.VMEM)


# -------------------- fused gate + MoE + residual + out_layer ---------------
def classifier_kernel(x_ref, wg_ref, w1f_ref, b1f_ref, w2f_ref, b2m_ref,
                      wo_ref, bo_ref, y_ref, gates_ref, load_ref):
    x = x_ref[...]                                                   # (B, D)

    # ----------------------------- Gate (eval path) -------------------------
    # TODO(synk): training-time noisy gating (softplus noise std + normal-CDF
    # load estimate) is omitted; this is the deterministic eval path.
    logits = jnp.dot(x, wg_ref[...], preferred_element_type=jnp.float32)  # (B, E)

    # Top-K by excluding the (E-K)=4 smallest logits: 4 short complement-min
    # iterations instead of K=12 masked-max iterations.  An index tie-break
    # (drop exactly one lane per iteration) keeps exactly K experts per row
    # even if logits tie.
    POS = jnp.float32(3e38)
    col = jax.lax.broadcasted_iota(jnp.int32, (B, NUM_EXPERT), 1).astype(jnp.float32)
    vals = logits
    for _ in range(NUM_EXPERT - K):
        cur = jnp.min(vals, axis=-1, keepdims=True)
        is_min = vals == cur
        drop_idx = jnp.min(jnp.where(is_min, col, jnp.float32(NUM_EXPERT)),
                           axis=-1, keepdims=True)
        vals = jnp.where(col == drop_idx, POS, vals)
    keep = vals < jnp.float32(1e38)                    # top-K mask, exactly K per row

    masked = jnp.where(keep, logits, jnp.float32(-1e30))
    m = jnp.max(masked, axis=-1, keepdims=True)
    e = jnp.where(keep, jnp.exp(masked - m), 0.0)
    denom = jnp.sum(e, axis=-1, keepdims=True)
    gates = e * pl.reciprocal(denom, approx=True)      # softmax over kept experts

    gates_ref[...] = gates
    # load = (gates > 0).sum(0), reusing the keep mask
    load_ref[...] = jnp.sum(keep.astype(jnp.float32), axis=0, keepdims=True)

    # --------------- MoE (dense combine) + residual + out_layer -------------
    # First expert layer for all experts at once: (B,32) @ (32,128).
    h = jnp.dot(x, w1f_ref[...], preferred_element_type=jnp.float32) + b1f_ref[...]
    h = jnp.maximum(h, 0.0)                                          # (B, EH)

    # Expand gates (B,E) -> (B,EH) expert-major via a one-hot expansion matrix
    # built in-kernel from iota (one tiny extra MXU op; avoids lane gathers).
    row_e = jax.lax.broadcasted_iota(jnp.int32, (NUM_EXPERT, EH), 0)
    col_f = jax.lax.broadcasted_iota(jnp.int32, (NUM_EXPERT, EH), 1)
    lo = row_e * HIDDEN
    expand = jnp.logical_and(col_f >= lo, col_f < lo + HIDDEN).astype(jnp.float32)
    gates_exp = jnp.dot(gates, expand, preferred_element_type=jnp.float32)   # (B, EH)

    # Second expert layer + gate-weighted combine: (B,128) @ (128,32).
    # The expert bias is gated separately: gates @ B2  (E, D).
    moe = (jnp.dot(h * gates_exp, w2f_ref[...], preferred_element_type=jnp.float32)
           + jnp.dot(gates, b2m_ref[...], preferred_element_type=jnp.float32))  # (B, D)

    xr = jnp.maximum(moe, 0.0) + x                                   # relu(out) + x
    y = jnp.dot(xr, wo_ref[...], preferred_element_type=jnp.float32) + bo_ref[...]
    y_ref[...] = y.astype(y_ref.dtype)


# ------------------------------- wrapper ------------------------------------
@functools.partial(jax.jit, static_argnames=("modality",))
def classifier_forward(x, params, modality: int):
    # glue: select the gate weights of self.gatting_network[modality]
    wg = params["w_gate"][modality]                                   # (D, E)

    # Lane-dense expert-major flattening, done once in XLA outside the kernel:
    #   w1 (E,D,H) -> (D, E*H): column e*H+h = w1[e, :, h]
    #   b1 (E,1,H) -> (1, E*H)
    #   w2 (E,H,D) -> (E*H, D): row    e*H+h = w2[e, h, :]
    #   b2 (E,1,D) -> (E, D)
    w1f = jnp.transpose(params["w1"], (1, 0, 2)).reshape(IN_DIM, EH)
    b1f = params["b1"].reshape(1, EH)
    w2f = params["w2"].reshape(EH, IN_DIM)
    b2m = params["b2"].reshape(NUM_EXPERT, IN_DIM)

    y, gates, load2d = pl.pallas_call(
        classifier_kernel,
        out_shape=(jax.ShapeDtypeStruct((B, OUT_DIM), jnp.float32),
                   jax.ShapeDtypeStruct((B, NUM_EXPERT), jnp.float32),
                   jax.ShapeDtypeStruct((1, NUM_EXPERT), jnp.float32)),
        in_specs=[_vmem()] * 8,
        out_specs=(_vmem(), _vmem(), _vmem()),
    )(x, wg, w1f, b1f, w2f, b2m, params["w_out"], params["b_out"])

    load = load2d[0].astype(jnp.int32)                                # (E,)
    return y, gates, load


# -------------------------- deterministic params ----------------------------
def init_params(key):
    ks = jax.random.split(key, 7)
    s = 0.1
    # nn.Linear weights are stored pre-transposed to (in, out) for x @ W.
    return dict(
        w_gate=s * jax.random.normal(ks[0], (NUM_MOD, IN_DIM, NUM_EXPERT), jnp.float32),
        w1=s * jax.random.normal(ks[1], (NUM_EXPERT, IN_DIM, HIDDEN), jnp.float32),
        b1=s * jax.random.normal(ks[2], (NUM_EXPERT, 1, HIDDEN), jnp.float32),
        w2=s * jax.random.normal(ks[3], (NUM_EXPERT, HIDDEN, IN_DIM), jnp.float32),
        b2=s * jax.random.normal(ks[4], (NUM_EXPERT, 1, IN_DIM), jnp.float32),
        w_out=s * jax.random.normal(ks[5], (IN_DIM, OUT_DIM), jnp.float32),
        b_out=s * jax.random.normal(ks[6], (1, OUT_DIM), jnp.float32),
    )


# ------------------------ pure-JAX reference (for checks) -------------------
def reference_forward(x, params, modality):
    wg = params["w_gate"][modality]
    logits = x @ wg
    kth = jax.lax.top_k(logits, K)[0][:, -1:]
    keep = logits >= kth
    gates = jax.nn.softmax(jnp.where(keep, logits, -jnp.inf), axis=-1)
    load = (gates > 0).sum(axis=0)
    h = jax.nn.relu(jnp.einsum("bd,edh->beh", x, params["w1"])
                    + params["b1"][:, 0, :][None])
    oe = jnp.einsum("beh,ehd->bed", h, params["w2"]) + params["b2"][:, 0, :][None]
    out = jnp.einsum("be,bed->bd", gates, oe)
    xr = jax.nn.relu(out) + x
    y = xr @ params["w_out"] + params["b_out"]
    return y, gates, load


if __name__ == "__main__":
    root = jax.random.PRNGKey(0)
    kx, kp = jax.random.split(root)
    x = jax.random.normal(kx, (B, IN_DIM), jnp.float32)
    params = init_params(kp)

    y, gates, load = classifier_forward(x, params, modality=0)
    jax.block_until_ready((y, gates, load))

    # sanity checks on gating semantics
    assert y.shape == (B, OUT_DIM)
    assert gates.shape == (B, NUM_EXPERT) and load.shape == (NUM_EXPERT,)
    nnz = (gates > 0).sum(axis=-1)
    assert bool((nnz == K).all()), "each row must route to exactly k experts"
    assert jnp.allclose(gates.sum(axis=-1), 1.0, atol=1e-2), "gates must sum to 1"
    assert int(load.sum()) == B * K

    # numerical check vs a pure-JAX reference of the same forward pass
    # (loose tolerance accounts for the approximate EUP reciprocal)
    y_ref, gates_ref, load_ref = reference_forward(x, params, 0)
    assert jnp.allclose(gates, gates_ref, atol=1e-2), "gates mismatch vs reference"
    assert jnp.allclose(y, y_ref, atol=1e-2), "output mismatch vs reference"
    assert bool((load == load_ref.astype(jnp.int32)).all()), "load mismatch vs reference"

    print("KERNEL_OK")
</pallas_src>

<mosaic_0001>
module attributes {stable_mosaic.version = 11 : i64} {
  func.func @classifier_kernel(%arg0: memref<8x32xf32, #tpu.memory_space<vmem>>, %arg1: memref<32x16xf32, #tpu.memory_space<vmem>>, %arg2: memref<32x128xf32, #tpu.memory_space<vmem>>, %arg3: memref<1x128xf32, #tpu.memory_space<vmem>>, %arg4: memref<128x32xf32, #tpu.memory_space<vmem>>, %arg5: memref<16x32xf32, #tpu.memory_space<vmem>>, %arg6: memref<32x8xf32, #tpu.memory_space<vmem>>, %arg7: memref<1x8xf32, #tpu.memory_space<vmem>>, %arg8: memref<8x8xf32, #tpu.memory_space<vmem>>, %arg9: memref<8x16xf32, #tpu.memory_space<vmem>>, %arg10: memref<1x16xf32, #tpu.memory_space<vmem>>) attributes {dimension_semantics = [], scalar_prefetch = 0 : i64, scratch_operands = 0 : i64, tpu.core_type = #tpu.core_type<tc>} {
    %c0 = arith.constant 0 : index
    %c0_0 = arith.constant 0 : index
    %0 = vector.load %arg0[%c0, %c0_0] : memref<8x32xf32, #tpu.memory_space<vmem>>, vector<8x32xf32>
    %c0_1 = arith.constant 0 : index
    %c0_2 = arith.constant 0 : index
    %1 = vector.load %arg1[%c0_1, %c0_2] : memref<32x16xf32, #tpu.memory_space<vmem>>, vector<32x16xf32>
    %cst = arith.constant dense<0.000000e+00> : vector<8x16xf32>
    %2 = tpu.matmul %0, %1, %cst {dimension_numbers = #tpu.dot_dimension_numbers<[1], [0], [0], [1], [0, 0, 1, 1], [], []>} : vector<8x32xf32>, vector<32x16xf32>, vector<8x16xf32> -> vector<8x16xf32>
    %3 = tpu.iota {dimensions = array<i32: 1>} : vector<8x16xi32>
    %4 = arith.sitofp %3 : vector<8x16xi32> to vector<8x16xf32>
    %cst_3 = arith.constant dense<0x7F800000> : vector<8xf32>
    %5 = vector.multi_reduction <minimumf>, %2, %cst_3 [1] : vector<8x16xf32> to vector<8xf32>
    %6 = vector.shape_cast %5 : vector<8xf32> to vector<8x1xf32>
    %7 = vector.broadcast %6 : vector<8x1xf32> to vector<8x16xf32>
    %8 = arith.cmpf oeq, %2, %7 : vector<8x16xf32>
    %cst_4 = arith.constant 1.600000e+01 : f32
    %9 = vector.broadcast %cst_4 : f32 to vector<8x16xf32>
    %10 = arith.select %8, %4, %9 : vector<8x16xi1>, vector<8x16xf32>
    %cst_5 = arith.constant dense<0x7F800000> : vector<8xf32>
    %11 = vector.multi_reduction <minimumf>, %10, %cst_5 [1] : vector<8x16xf32> to vector<8xf32>
    %12 = vector.shape_cast %11 : vector<8xf32> to vector<8x1xf32>
    %13 = vector.broadcast %12 : vector<8x1xf32> to vector<8x16xf32>
    %14 = arith.cmpf oeq, %4, %13 : vector<8x16xf32>
    %cst_6 = arith.constant 3.000000e+38 : f32
    %15 = vector.broadcast %cst_6 : f32 to vector<8x16xf32>
    %16 = arith.select %14, %15, %2 : vector<8x16xi1>, vector<8x16xf32>
    %cst_7 = arith.constant dense<0x7F800000> : vector<8xf32>
    %17 = vector.multi_reduction <minimumf>, %16, %cst_7 [1] : vector<8x16xf32> to vector<8xf32>
    %18 = vector.shape_cast %17 : vector<8xf32> to vector<8x1xf32>
    %19 = vector.broadcast %18 : vector<8x1xf32> to vector<8x16xf32>
    %20 = arith.cmpf oeq, %16, %19 : vector<8x16xf32>
    %cst_8 = arith.constant 1.600000e+01 : f32
    %21 = vector.broadcast %cst_8 : f32 to vector<8x16xf32>
    %22 = arith.select %20, %4, %21 : vector<8x16xi1>, vector<8x16xf32>
    %cst_9 = arith.constant dense<0x7F800000> : vector<8xf32>
    %23 = vector.multi_reduction <minimumf>, %22, %cst_9 [1] : vector<8x16xf32> to vector<8xf32>
    %24 = vector.shape_cast %23 : vector<8xf32> to vector<8x1xf32>
    %25 = vector.broadcast %24 : vector<8x1xf32> to vector<8x16xf32>
    %26 = arith.cmpf oeq, %4, %25 : vector<8x16xf32>
    %cst_10 = arith.constant 3.000000e+38 : f32
    %27 = vector.broadcast %cst_10 : f32 to vector<8x16xf32>
    %28 = arith.select %26, %27, %16 : vector<8x16xi1>, vector<8x16xf32>
    %cst_11 = arith.constant dense<0x7F800000> : vector<8xf32>
    %29 = vector.multi_reduction <minimumf>, %28, %cst_11 [1] : vector<8x16xf32> to vector<8xf32>
    %30 = vector.shape_cast %29 : vector<8xf32> to vector<8x1xf32>
    %31 = vector.broadcast %30 : vector<8x1xf32> to vector<8x16xf32>
    %32 = arith.cmpf oeq, %28, %31 : vector<8x16xf32>
    %cst_12 = arith.constant 1.600000e+01 : f32
    %33 = vector.broadcast %cst_12 : f32 to vector<8x16xf32>
    %34 = arith.select %32, %4, %33 : vector<8x16xi1>, vector<8x16xf32>
    %cst_13 = arith.constant dense<0x7F800000> : vector<8xf32>
    %35 = vector.multi_reduction <minimumf>, %34, %cst_13 [1] : vector<8x16xf32> to vector<8xf32>
    %36 = vector.shape_cast %35 : vector<8xf32> to vector<8x1xf32>
    %37 = vector.broadcast %36 : vector<8x1xf32> to vector<8x16xf32>
    %38 = arith.cmpf oeq, %4, %37 : vector<8x16xf32>
    %cst_14 = arith.constant 3.000000e+38 : f32
    %39 = vector.broadcast %cst_14 : f32 to vector<8x16xf32>
    %40 = arith.select %38, %39, %28 : vector<8x16xi1>, vector<8x16xf32>
    %cst_15 = arith.constant dense<0x7F800000> : vector<8xf32>
    %41 = vector.multi_reduction <minimumf>, %40, %cst_15 [1] : vector<8x16xf32> to vector<8xf32>
    %42 = vector.shape_cast %41 : vector<8xf32> to vector<8x1xf32>
    %43 = vector.broadcast %42 : vector<8x1xf32> to vector<8x16xf32>
    %44 = arith.cmpf oeq, %40, %43 : vector<8x16xf32>
    %cst_16 = arith.constant 1.600000e+01 : f32
    %45 = vector.broadcast %cst_16 : f32 to vector<8x16xf32>
    %46 = arith.select %44, %4, %45 : vector<8x16xi1>, vector<8x16xf32>
    %cst_17 = arith.constant dense<0x7F800000> : vector<8xf32>
    %47 = vector.multi_reduction <minimumf>, %46, %cst_17 [1] : vector<8x16xf32> to vector<8xf32>
    %48 = vector.shape_cast %47 : vector<8xf32> to vector<8x1xf32>
    %49 = vector.broadcast %48 : vector<8x1xf32> to vector<8x16xf32>
    %50 = arith.cmpf oeq, %4, %49 : vector<8x16xf32>
    %cst_18 = arith.constant 3.000000e+38 : f32
    %51 = vector.broadcast %cst_18 : f32 to vector<8x16xf32>
    %52 = arith.select %50, %51, %40 : vector<8x16xi1>, vector<8x16xf32>
    %cst_19 = arith.constant 9.99999968E+37 : f32
    %53 = vector.broadcast %cst_19 : f32 to vector<8x16xf32>
    %54 = arith.cmpf olt, %52, %53 : vector<8x16xf32>
    %cst_20 = arith.constant -1.000000e+30 : f32
    %55 = vector.broadcast %cst_20 : f32 to vector<8x16xf32>
    %56 = arith.select %54, %2, %55 : vector<8x16xi1>, vector<8x16xf32>
    %cst_21 = arith.constant dense<0xFF800000> : vector<8xf32>
    %57 = vector.multi_reduction <maximumf>, %56, %cst_21 [1] : vector<8x16xf32> to vector<8xf32>
    %58 = vector.shape_cast %57 : vector<8xf32> to vector<8x1xf32>
    %59 = vector.broadcast %58 : vector<8x1xf32> to vector<8x16xf32>
    %60 = arith.subf %56, %59 : vector<8x16xf32>
    %61 = math.exp %60 : vector<8x16xf32>
    %cst_22 = arith.constant 0.000000e+00 : f32
    %62 = vector.broadcast %cst_22 : f32 to vector<8x16xf32>
    %63 = arith.select %54, %61, %62 : vector<8x16xi1>, vector<8x16xf32>
    %cst_23 = arith.constant dense<0.000000e+00> : vector<8xf32>
    %64 = vector.multi_reduction <add>, %63, %cst_23 [1] : vector<8x16xf32> to vector<8xf32>
    %65 = vector.shape_cast %64 : vector<8xf32> to vector<8x1xf32>
    %66 = tpu.reciprocal %65 {approx = true} : vector<8x1xf32> -> vector<8x1xf32>
    %67 = vector.broadcast %66 : vector<8x1xf32> to vector<8x16xf32>
    %68 = arith.mulf %63, %67 : vector<8x16xf32>
    %c0_24 = arith.constant 0 : index
    %c0_25 = arith.constant 0 : index
    %69 = vector.load %arg9[%c0_24, %c0_25] : memref<8x16xf32, #tpu.memory_space<vmem>>, vector<8x16xf32>
    tpu.vector_store %arg9[%c0_24, %c0_25], %68 {strides = array<i32>} : memref<8x16xf32, #tpu.memory_space<vmem>>, vector<8x16xf32>,
    %70 = arith.extui %54 : vector<8x16xi1> to vector<8x16xi32>
    %71 = arith.sitofp %70 : vector<8x16xi32> to vector<8x16xf32>
    %cst_26 = arith.constant dense<0.000000e+00> : vector<16xf32>
    %72 = vector.multi_reduction <add>, %71, %cst_26 [0] : vector<8x16xf32> to vector<16xf32>
    %73 = vector.shape_cast %72 : vector<16xf32> to vector<1x16xf32>
    %c0_27 = arith.constant 0 : index
    %c0_28 = arith.constant 0 : index
    %74 = vector.load %arg10[%c0_27, %c0_28] : memref<1x16xf32, #tpu.memory_space<vmem>>, vector<1x16xf32>
    tpu.vector_store %arg10[%c0_27, %c0_28], %73 {strides = array<i32>} : memref<1x16xf32, #tpu.memory_space<vmem>>, vector<1x16xf32>,
    %c0_29 = arith.constant 0 : index
    %c0_30 = arith.constant 0 : index
    %75 = vector.load %arg2[%c0_29, %c0_30] : memref<32x128xf32, #tpu.memory_space<vmem>>, vector<32x128xf32>
    %cst_31 = arith.constant dense<0.000000e+00> : vector<8x128xf32>
    %76 = tpu.matmul %0, %75, %cst_31 {dimension_numbers = #tpu.dot_dimension_numbers<[1], [0], [0], [1], [0, 0, 1, 1], [], []>} : vector<8x32xf32>, vector<32x128xf32>, vector<8x128xf32> -> vector<8x128xf32>
    %c0_32 = arith.constant 0 : index
    %c0_33 = arith.constant 0 : index
    %77 = vector.load %arg3[%c0_32, %c0_33] : memref<1x128xf32, #tpu.memory_space<vmem>>, vector<1x128xf32>
    %78 = vector.broadcast %77 : vector<1x128xf32> to vector<8x128xf32>
    %79 = arith.addf %76, %78 : vector<8x128xf32>
    %cst_34 = arith.constant 0.000000e+00 : f32
    %80 = vector.broadcast %cst_34 : f32 to vector<8x128xf32>
    %81 = arith.maximumf %79, %80 : vector<8x128xf32>
    %82 = tpu.iota {dimensions = array<i32: 0>} : vector<16x128xi32>
    %83 = tpu.iota {dimensions = array<i32: 1>} : vector<16x128xi32>
    %c8_i32 = arith.constant 8 : i32
    %84 = vector.broadcast %c8_i32 : i32 to vector<16x128xi32>
    %85 = arith.muli %82, %84 : vector<16x128xi32>
    %86 = arith.cmpi sge, %83, %85 : vector<16x128xi32>
    %c8_i32_35 = arith.constant 8 : i32
    %87 = vector.broadcast %c8_i32_35 : i32 to vector<16x128xi32>
    %88 = arith.addi %85, %87 : vector<16x128xi32>
    %89 = arith.cmpi slt, %83, %88 : vector<16x128xi32>
    %90 = arith.andi %86, %89 : vector<16x128xi1>
    %91 = arith.extui %90 : vector<16x128xi1> to vector<16x128xi32>
    %92 = arith.sitofp %91 : vector<16x128xi32> to vector<16x128xf32>
    %cst_36 = arith.constant dense<0.000000e+00> : vector<8x128xf32>
    %93 = tpu.matmul %68, %92, %cst_36 {dimension_numbers = #tpu.dot_dimension_numbers<[1], [0], [0], [1], [0, 0, 1, 1], [], []>} : vector<8x16xf32>, vector<16x128xf32>, vector<8x128xf32> -> vector<8x128xf32>
    %94 = arith.mulf %81, %93 : vector<8x128xf32>
    %c0_37 = arith.constant 0 : index
    %c0_38 = arith.constant 0 : index
    %95 = vector.load %arg4[%c0_37, %c0_38] : memref<128x32xf32, #tpu.memory_space<vmem>>, vector<128x32xf32>
    %cst_39 = arith.constant dense<0.000000e+00> : vector<8x32xf32>
    %96 = tpu.matmul %94, %95, %cst_39 {dimension_numbers = #tpu.dot_dimension_numbers<[1], [0], [0], [1], [0, 0, 1, 1], [], []>} : vector<8x128xf32>, vector<128x32xf32>, vector<8x32xf32> -> vector<8x32xf32>
    %c0_40 = arith.constant 0 : index
    %c0_41 = arith.constant 0 : index
    %97 = vector.load %arg5[%c0_40, %c0_41] : memref<16x32xf32, #tpu.memory_space<vmem>>, vector<16x32xf32>
    %cst_42 = arith.constant dense<0.000000e+00> : vector<8x32xf32>
    %98 = tpu.matmul %68, %97, %cst_42 {dimension_numbers = #tpu.dot_dimension_numbers<[1], [0], [0], [1], [0, 0, 1, 1], [], []>} : vector<8x16xf32>, vector<16x32xf32>, vector<8x32xf32> -> vector<8x32xf32>
    %99 = arith.addf %96, %98 : vector<8x32xf32>
    %cst_43 = arith.constant 0.000000e+00 : f32
    %100 = vector.broadcast %cst_43 : f32 to vector<8x32xf32>
    %101 = arith.maximumf %99, %100 : vector<8x32xf32>
    %102 = arith.addf %101, %0 : vector<8x32xf32>
    %c0_44 = arith.constant 0 : index
    %c0_45 = arith.constant 0 : index
    %103 = vector.load %arg6[%c0_44, %c0_45] : memref<32x8xf32, #tpu.memory_space<vmem>>, vector<32x8xf32>
    %cst_46 = arith.constant dense<0.000000e+00> : vector<8x8xf32>
    %104 = tpu.matmul %102, %103, %cst_46 {dimension_numbers = #tpu.dot_dimension_numbers<[1], [0], [0], [1], [0, 0, 1, 1], [], []>} : vector<8x32xf32>, vector<32x8xf32>, vector<8x8xf32> -> vector<8x8xf32>
    %c0_47 = arith.constant 0 : index
    %c0_48 = arith.constant 0 : index
    %105 = vector.load %arg7[%c0_47, %c0_48] : memref<1x8xf32, #tpu.memory_space<vmem>>, vector<1x8xf32>
    %106 = vector.broadcast %105 : vector<1x8xf32> to vector<8x8xf32>
    %107 = arith.addf %104, %106 : vector<8x8xf32>
    %c0_49 = arith.constant 0 : index
    %c0_50 = arith.constant 0 : index
    %108 = vector.load %arg8[%c0_49, %c0_50] : memref<8x8xf32, #tpu.memory_space<vmem>>, vector<8x8xf32>
    tpu.vector_store %arg8[%c0_49, %c0_50], %107 {strides = array<i32>} : memref<8x8xf32, #tpu.memory_space<vmem>>, vector<8x8xf32>,
    return
  }
}

</mosaic_0001>

<llo_original>
// kernel: classifier_forward.1
$region0: #{classifier_forward.1}
  #allocation0 [shape = 'u32[]', space=smem, size = 0x4, offset = 0x4, fixed_abs, tag = 'smem constant byte address 0x4 - core index']
  #allocation1 [shape = 'u32[144,128]{1,0:T(1,128)}', space=vmem, size = 0x12000, scoped, tag = 'internal scratch']
  %s0 = inlined_call_operand.vmem [shape: f32[8,32], index: 0, kind: input, shape index: {}]
  %s1 = inlined_call_operand.vmem [shape: f32[32,16], index: 1, kind: input, shape index: {}]
  %s2 = inlined_call_operand.vmem [shape: f32[32,128], index: 2, kind: input, shape index: {}]
  %s3 = inlined_call_operand.vmem [shape: f32[1,128], index: 3, kind: input, shape index: {}]
  %s4 = inlined_call_operand.vmem [shape: f32[128,32], index: 4, kind: input, shape index: {}]
  %s5 = inlined_call_operand.vmem [shape: f32[16,32], index: 5, kind: input, shape index: {}]
  %s6 = inlined_call_operand.vmem [shape: f32[32,8], index: 6, kind: input, shape index: {}]
  %s7 = inlined_call_operand.vmem [shape: f32[1,8], index: 7, kind: input, shape index: {}]
  %s8 = inlined_call_operand.hbm [shape: f32[8,8], index: 8, kind: output, shape index: {0}]
  %s9 = inlined_call_operand.hbm [shape: f32[8,16], index: 9, kind: output, shape index: {1}]
  %s10 = inlined_call_operand.vmem [shape: f32[1,16], index: 10, kind: output, shape index: {2}]
  %11 = xla_tuple %s8, %s9, %s10
  %s12 = sld [smem:[#allocation0]]
  $region58: #{classifier_forward.1} parent=0
    _
  %s14 = ssub.s32 1, %s12
  %s15 = scalar_select 0, %s14, %s12
  $region1: #{classifier_forward.1} parent=0
    #allocation2 [shape = 'u8[4096]{0}', space=vmem, size = 0x1000, scoped, tag = 'output window, operand 0, single buffered']
    #allocation3 [shape = 's32[1]{0}', space=sflag, size = 0x4, scoped, tag = 'scoped memory for classifier_forward.1']
    #allocation4 [shape = 'u8[4096]{0}', space=vmem, size = 0x1000, scoped, tag = 'output window, operand 1, single buffered']
    #allocation5 [shape = 's32[1]{0}', space=sflag, size = 0x4, scoped, tag = 'scoped memory for classifier_forward.1']
    %16 = vsyncpa [#allocation3], 0
    %17 = vsyncpa [#allocation5], 0
    // Predicated region
    $region2: #{classifier_forward.1} parent=1 // pred_check
      _
    $region3: #{classifier_forward.1} parent=1 // pred_check_branch
      %19 = sbr.rel (0) target = $region5
    $region4: #{classifier_forward.1} parent=1 // pred_region
      _
    $region5: #{classifier_forward.1} parent=1 // pred_fallthru
      _
    // Predicated region
    $region6: #{classifier_forward.1} parent=1 // pred_check
      _
    $region7: #{classifier_forward.1} parent=1 // pred_check_branch
      %21 = sbr.rel (0) target = $region9
    $region8: #{classifier_forward.1} parent=1 // pred_region
      _
    $region9: #{classifier_forward.1} parent=1 // pred_fallthru
      _
    // Predicated region
    $region10: #{classifier_forward.1} parent=1 // pred_check
      _
    $region11: #{classifier_forward.1} parent=1 // pred_check_branch
      %23 = sbr.rel (0) target = $region13
    $region12: #{classifier_forward.1} parent=1 // pred_region
      _
    $region13: #{classifier_forward.1} parent=1 // pred_fallthru
      _
    // Predicated region
    $region14: #{classifier_forward.1} parent=1 // pred_check
      _
    $region15: #{classifier_forward.1} parent=1 // pred_check_branch
      %25 = sbr.rel (0) target = $region17
    $region16: #{classifier_forward.1} parent=1 // pred_region
      _
    $region17: #{classifier_forward.1} parent=1 // pred_fallthru
      _
    // Predicated region
    $region18: #{classifier_forward.1} parent=1 // pred_check
      _
    $region19: #{classifier_forward.1} parent=1 // pred_check_branch
      %27 = sbr.rel (0) target = $region21
    $region20: #{classifier_forward.1} parent=1 // pred_region
      _
    $region21: #{classifier_forward.1} parent=1 // pred_fallthru
      _
    // Predicated region
    $region22: #{classifier_forward.1} parent=1 // pred_check
      _
    $region23: #{classifier_forward.1} parent=1 // pred_check_branch
      %29 = sbr.rel (0) target = $region25
    $region24: #{classifier_forward.1} parent=1 // pred_region
      _
    $region25: #{classifier_forward.1} parent=1 // pred_fallthru
      _
    // Predicated region
    $region26: #{classifier_forward.1} parent=1 // pred_check
      _
    $region27: #{classifier_forward.1} parent=1 // pred_check_branch
      %31 = sbr.rel (0) target = $region29
    $region28: #{classifier_forward.1} parent=1 // pred_region
      _
    $region29: #{classifier_forward.1} parent=1 // pred_fallthru
      _
    // Predicated region
    $region30: #{classifier_forward.1} parent=1 // pred_check
      _
    $region31: #{classifier_forward.1} parent=1 // pred_check_branch
      %33 = sbr.rel (0) target = $region33
    $region32: #{classifier_forward.1} parent=1 // pred_region
      _
    $region33: #{classifier_forward.1} parent=1 // pred_fallthru
      _
    %v34 = vld [vmem:[%s0] sm:$0xff]
    %v35 = vld [vmem:[%s1] sm:$0xff]
    %v36 = vld [vmem:[%s1 + $0x8] sm:$0xff]
    %v37 = vld [vmem:[%s1 + $0x10] sm:$0xff]
    %v38 = vld [vmem:[%s1 + $0x18] sm:$0xff]
    %vm39 = vcmask 261120
    %v41 = vsel %vm39, %v34, 0
    %43 = vmatprep.subr.mxu0 0.0
    %44 = vmatpush1.msra.mxu0 %v35
    %45 = vmatprep.subr.mxu0 0.0
    %46 = vmatpush1.msra.mxu0 %v36
    %47 = vmatprep.subr.mxu0 0.0
    %48 = vmatpush1.msra.mxu0 %v37
    %49 = vmatprep.subr.mxu0 0.0
    %50 = vmatpush1.msra.mxu0 %v38
    %51 = vmatprep.subr.mxu0 0.0
    %52 = vmatpush1.msra.mxu0 0.0
    %53 = vmatprep.subr.mxu0 0.0
    %54 = vmatpush1.msra.mxu0 0.0
    %55 = vmatprep.subr.mxu0 0.0
    %56 = vmatpush1.msra.mxu0 0.0
    %57 = vmatprep.subr.mxu0 0.0
    %58 = vmatpush1.msra.mxu0 0.0
    %59 = vmatprep.subr.mxu0 0.0
    %60 = vmatpush1.msra.mxu0 0.0
    %61 = vmatprep.subr.mxu0 0.0
    %62 = vmatpush1.msra.mxu0 0.0
    %63 = vmatprep.subr.mxu0 0.0
    %64 = vmatpush1.msra.mxu0 0.0
    %65 = vmatprep.subr.mxu0 0.0
    %66 = vmatpush1.msra.mxu0 0.0
    %67 = vmatprep.subr.mxu0 0.0
    %68 = vmatpush1.msra.mxu0 0.0
    %69 = vmatprep.subr.mxu0 0.0
    %70 = vmatpush1.msra.mxu0 0.0
    %71 = vmatprep.subr.mxu0 0.0
    %72 = vmatpush1.msra.mxu0 0.0
    %73 = vmatprep.subr.mxu0 0.0
    %74 = vmatpush1.msra.mxu0 0.0
    %75 = vmatprep.subr.mxu0 0.0
    %76 = vmatpush1.msra.mxu0 0.0
    %77 = vmatprep.subr.mxu0 0.0
    %78 = vmatpush1.msra.mxu0 0.0
    %79 = vmatprep.subr.mxu0 0.0
    %80 = vmatpush1.msra.mxu0 0.0
    %81 = vmatprep.subr.mxu0 0.0
    %82 = vmatpush1.msra.mxu0 0.0
    %83 = vmatprep.subr.mxu0 0.0
    %84 = vmatpush1.msra.mxu0 0.0
    %85 = vmatprep.subr.mxu0 0.0
    %86 = vmatpush1.msra.mxu0 0.0
    %87 = vmatprep.subr.mxu0 0.0
    %88 = vmatpush1.msra.mxu0 0.0
    %89 = vmatprep.subr.mxu0 0.0
    %90 = vmatpush1.msra.mxu0 0.0
    %91 = vmatprep.subr.mxu0 0.0
    %92 = vmatpush1.msra.mxu0 0.0
    %93 = vmatprep.subr.mxu0 0.0
    %94 = vmatpush1.msra.mxu0 0.0
    %95 = vmatprep.subr.mxu0 0.0
    %96 = vmatpush1.msra.mxu0 0.0
    %97 = vmatprep.subr.mxu0 0.0
    %98 = vmatpush1.msra.mxu0 0.0
    %99 = vmatprep.subr.mxu0 0.0
    %100 = vmatpush1.msra.mxu0 0.0
    %101 = vmatprep.subr.mxu0 0.0
    %102 = vmatpush1.msra.mxu0 0.0
    %103 = vmatprep.subr.mxu0 0.0
    %104 = vmatpush1.msra.mxu0 0.0
    %105 = vmatprep.subr.mxu0 0.0
    %106 = vmatpush1.msra.mxu0 0.0
    %107 = vmatprep.mubr.f32.mxu0 0.0
    %108 = vmatmul.mubr.f32.gmra.mrb[0].mxu0 %v41
    %v109 = vpop.f32.mrb[0].mxu0
    %v110 = vadd.f32 0.0, %v109
    %v111 = vpop.f32.mrb[0].mxu0
    %112 = vdwg.mxu0
    %v113 = vlaneseq
    %v114 = vand.u32 %v113, 127
    %v115 = vcvt.s32.f32 %v114
    %vm116 = vcmask 130048
    %v117 = vsel %vm116, %v110, inf
    %118 = vmin.xlane.f32.xlu0 %v117
    %v119 = vpop.xlane.xlu0 %118
    %vm120 = vcmp.eq.f32.partialorder %v110, %v119
    %v121 = vsel %vm120, %v115, 16.0
    %v122 = vsel %vm116, %v121, inf
    %123 = vmin.xlane.f32.xlu0 %v122
    %v124 = vpop.xlane.xlu0 %123
    %vm125 = vcmp.eq.f32.partialorder %v115, %v124
    %v126 = vsel %vm125, 3e+38, %v110
    %v127 = vsel %vm116, %v126, inf
    %128 = vmin.xlane.f32.xlu0 %v127
    %v129 = vpop.xlane.xlu0 %128
    %vm130 = vcmp.eq.f32.partialorder %v126, %v129
    %v131 = vsel %vm130, %v115, 16.0
    %v132 = vsel %vm116, %v131, inf
    %133 = vmin.xlane.f32.xlu0 %v132
    %v134 = vpop.xlane.xlu0 %133
    %vm135 = vcmp.eq.f32.partialorder %v115, %v134
    %v136 = vsel %vm135, 3e+38, %v126
    %v137 = vsel %vm116, %v136, inf
    %138 = vmin.xlane.f32.xlu0 %v137
    %v139 = vpop.xlane.xlu0 %138
    %vm140 = vcmp.eq.f32.partialorder %v136, %v139
    %v141 = vsel %vm140, %v115, 16.0
    %v142 = vsel %vm116, %v141, inf
    %143 = vmin.xlane.f32.xlu0 %v142
    %v144 = vpop.xlane.xlu0 %143
    %vm145 = vcmp.eq.f32.partialorder %v115, %v144
    %v146 = vsel %vm145, 3e+38, %v136
    %v147 = vsel %vm116, %v146, inf
    %148 = vmin.xlane.f32.xlu0 %v147
    %v149 = vpop.xlane.xlu0 %148
    %vm150 = vcmp.eq.f32.partialorder %v146, %v149
    %v151 = vsel %vm150, %v115, 16.0
    %v152 = vsel %vm116, %v151, inf
    %153 = vmin.xlane.f32.xlu0 %v152
    %v154 = vpop.xlane.xlu0 %153
    %vm155 = vcmp.eq.f32.partialorder %v115, %v154
    %v156 = vsel %vm155, 3e+38, %v146
    %vm157 = vcmp.lt.f32.partialorder %v156, 1e+38
    %v158 = vsel %vm157, %v110, -1e+30
    %v159 = vsel %vm116, %v158, -inf
    %160 = vmax.xlane.f32.xlu0 %v159
    %v161 = vpop.xlane.xlu0 %160
    %v162 = vsub.f32 %v158, %v161
    %v163 = vmul.f32 %v162, 1.442695
    %v164 = vpow.pop %v163
    %v165 = vsel %vm157, %v164, 0.0
    %v166 = vsel %vm116, %v165, 0.0
    %167 = vadd.xlane.f32.xlu0 %v166
    %v168 = vpop.xlane.xlu0 %167
    %v169 = vrcp.pop %v168
    %v170 = vmul.f32 %v165, %v169
    %171 = vst.msk [vmem:[#allocation4] sm:$0xff] %vm116, %v170
    %v172 = vsel %vm157, 1, 0
    %v173 = vcvt.s32.f32 %v172
    %v174 = vsel %vm116, %v173, 0.0
    %v175 = vrot.slane %v174, 4
    %v176 = vadd.f32 %v174, %v175
    %v177 = vrot.slane %v176, 2
    %v178 = vadd.f32 %v176, %v177
    %v179 = vrot.slane %v178, 1
    %v180 = vadd.f32 %v178, %v179
    %vm181 = vcmask 122880
    %182 = vst.msk [vmem:[%s10] sm:$0x1] %vm181, %v180
    %v183 = vld [vmem:[%s2] sm:$0xff]
    %v184 = vld [vmem:[%s2 + $0x8] sm:$0xff]
    %v185 = vld [vmem:[%s2 + $0x10] sm:$0xff]
    %v186 = vld [vmem:[%s2 + $0x18] sm:$0xff]
    %v187 = vld [vmem:[%s3] sm:$0x1]
    %v189 = vlaneseq
    %v190 = vshrl.u32 %v189, 7
    %v191 = vsub.s32 0, %v190
    %v192 = vrot.slane %v187, %v191
    %194 = vmatprep.subr.mxu0 0.0
    %195 = vmatpush1.msra.mxu0 %v183
    %196 = vmatprep.subr.mxu0 0.0
    %197 = vmatpush1.msra.mxu0 %v184
    %198 = vmatprep.subr.mxu0 0.0
    %199 = vmatpush1.msra.mxu0 %v185
    %200 = vmatprep.subr.mxu0 0.0
    %201 = vmatpush1.msra.mxu0 %v186
    %202 = vmatprep.subr.mxu0 0.0
    %203 = vmatpush1.msra.mxu0 0.0
    %204 = vmatprep.subr.mxu0 0.0
    %205 = vmatpush1.msra.mxu0 0.0
    %206 = vmatprep.subr.mxu0 0.0
    %207 = vmatpush1.msra.mxu0 0.0
    %208 = vmatprep.subr.mxu0 0.0
    %209 = vmatpush1.msra.mxu0 0.0
    %210 = vmatprep.subr.mxu0 0.0
    %211 = vmatpush1.msra.mxu0 0.0
    %212 = vmatprep.subr.mxu0 0.0
    %213 = vmatpush1.msra.mxu0 0.0
    %214 = vmatprep.subr.mxu0 0.0
    %215 = vmatpush1.msra.mxu0 0.0
    %216 = vmatprep.subr.mxu0 0.0
    %217 = vmatpush1.msra.mxu0 0.0
    %218 = vmatprep.subr.mxu0 0.0
    %219 = vmatpush1.msra.mxu0 0.0
    %220 = vmatprep.subr.mxu0 0.0
    %221 = vmatpush1.msra.mxu0 0.0
    %222 = vmatprep.subr.mxu0 0.0
    %223 = vmatpush1.msra.mxu0 0.0
    %224 = vmatprep.subr.mxu0 0.0
    %225 = vmatpush1.msra.mxu0 0.0
    %226 = vmatprep.subr.mxu0 0.0
    %227 = vmatpush1.msra.mxu0 0.0
    %228 = vmatprep.subr.mxu0 0.0
    %229 = vmatpush1.msra.mxu0 0.0
    %230 = vmatprep.subr.mxu0 0.0
    %231 = vmatpush1.msra.mxu0 0.0
    %232 = vmatprep.subr.mxu0 0.0
    %233 = vmatpush1.msra.mxu0 0.0
    %234 = vmatprep.subr.mxu0 0.0
    %235 = vmatpush1.msra.mxu0 0.0
    %236 = vmatprep.subr.mxu0 0.0
    %237 = vmatpush1.msra.mxu0 0.0
    %238 = vmatprep.subr.mxu0 0.0
    %239 = vmatpush1.msra.mxu0 0.0
    %240 = vmatprep.subr.mxu0 0.0
    %241 = vmatpush1.msra.mxu0 0.0
    %242 = vmatprep.subr.mxu0 0.0
    %243 = vmatpush1.msra.mxu0 0.0
    %244 = vmatprep.subr.mxu0 0.0
    %245 = vmatpush1.msra.mxu0 0.0
    %246 = vmatprep.subr.mxu0 0.0
    %247 = vmatpush1.msra.mxu0 0.0
    %248 = vmatprep.subr.mxu0 0.0
    %249 = vmatpush1.msra.mxu0 0.0
    %250 = vmatprep.subr.mxu0 0.0
    %251 = vmatpush1.msra.mxu0 0.0
    %252 = vmatprep.subr.mxu0 0.0
    %253 = vmatpush1.msra.mxu0 0.0
    %254 = vmatprep.subr.mxu0 0.0
    %255 = vmatpush1.msra.mxu0 0.0
    %256 = vmatprep.subr.mxu0 0.0
    %257 = vmatpush1.msra.mxu0 0.0
    %258 = vmatprep.mubr.f32.mxu0 0.0
    %259 = vmatmul.mubr.f32.gmra.mrb[0].mxu0 %v41
    %v260 = vpop.f32.mrb[0].mxu0
    %v261 = vadd.f32 %v192, %v260
    %v262 = vpop.f32.mrb[0].mxu0
    %263 = vdwg.mxu0
    %v264 = vmax.f32 %v261, 0.0
    %v265 = vlaneseq
    %v266 = vshrl.u32 %v265, 7
    %v267 = vadd.s32 %v266, 8
    %v268 = vmul.u32 %v266, 8
    %v269 = vmul.u32 %v267, 8
    %vm270 = vcmp.ge.s32.totalorder %v114, %v268
    %vm271 = vcmp.ge.s32.totalorder %v114, %v269
    %v272 = vadd.s32 %v268, 8
    %v273 = vadd.s32 %v269, 8
    %vm274 = vcmp.lt.s32.totalorder %v114, %v272
    %vm275 = vcmp.lt.s32.totalorder %v114, %v273
    %vm276 = vmand %vm270, %vm274
    %vm277 = vmand %vm271, %vm275
    %v278 = vsel %vm276, 1, 0
    %v279 = vsel %vm277, 1, 0
    %v280 = vcvt.s32.f32 %v278
    %v281 = vcvt.s32.f32 %v279
    %v283 = vsel %vm116, %v170, 0
    %285 = vmatprep.subr.mxu0 0.0
    %286 = vmatpush1.msra.mxu0 %v280
    %287 = vmatprep.subr.mxu0 0.0
    %288 = vmatpush1.msra.mxu0 %v281
    %289 = vmatprep.subr.mxu0 0.0
    %290 = vmatpush1.msra.mxu0 0.0
    %291 = vmatprep.subr.mxu0 0.0
    %292 = vmatpush1.msra.mxu0 0.0
    %293 = vmatprep.subr.mxu0 0.0
    %294 = vmatpush1.msra.mxu0 0.0
    %295 = vmatprep.subr.mxu0 0.0
    %296 = vmatpush1.msra.mxu0 0.0
    %297 = vmatprep.subr.mxu0 0.0
    %298 = vmatpush1.msra.mxu0 0.0
    %299 = vmatprep.subr.mxu0 0.0
    %300 = vmatpush1.msra.mxu0 0.0
    %301 = vmatprep.subr.mxu0 0.0
    %302 = vmatpush1.msra.mxu0 0.0
    %303 = vmatprep.subr.mxu0 0.0
    %304 = vmatpush1.msra.mxu0 0.0
    %305 = vmatprep.subr.mxu0 0.0
    %306 = vmatpush1.msra.mxu0 0.0
    %307 = vmatprep.subr.mxu0 0.0
    %308 = vmatpush1.msra.mxu0 0.0
    %309 = vmatprep.subr.mxu0 0.0
    %310 = vmatpush1.msra.mxu0 0.0
    %311 = vmatprep.subr.mxu0 0.0
    %312 = vmatpush1.msra.mxu0 0.0
    %313 = vmatprep.subr.mxu0 0.0
    %314 = vmatpush1.msra.mxu0 0.0
    %315 = vmatprep.subr.mxu0 0.0
    %316 = vmatpush1.msra.mxu0 0.0
    %317 = vmatprep.subr.mxu0 0.0
    %318 = vmatpush1.msra.mxu0 0.0
    %319 = vmatprep.subr.mxu0 0.0
    %320 = vmatpush1.msra.mxu0 0.0
    %321 = vmatprep.subr.mxu0 0.0
    %322 = vmatpush1.msra.mxu0 0.0
    %323 = vmatprep.subr.mxu0 0.0
    %324 = vmatpush1.msra.mxu0 0.0
    %325 = vmatprep.subr.mxu0 0.0
    %326 = vmatpush1.msra.mxu0 0.0
    %327 = vmatprep.subr.mxu0 0.0
    %328 = vmatpush1.msra.mxu0 0.0
    %329 = vmatprep.subr.mxu0 0.0
    %330 = vmatpush1.msra.mxu0 0.0
    %331 = vmatprep.subr.mxu0 0.0
    %332 = vmatpush1.msra.mxu0 0.0
    %333 = vmatprep.subr.mxu0 0.0
    %334 = vmatpush1.msra.mxu0 0.0
    %335 = vmatprep.subr.mxu0 0.0
    %336 = vmatpush1.msra.mxu0 0.0
    %337 = vmatprep.subr.mxu0 0.0
    %338 = vmatpush1.msra.mxu0 0.0
    %339 = vmatprep.subr.mxu0 0.0
    %340 = vmatpush1.msra.mxu0 0.0
    %341 = vmatprep.subr.mxu0 0.0
    %342 = vmatpush1.msra.mxu0 0.0
    %343 = vmatprep.subr.mxu0 0.0
    %344 = vmatpush1.msra.mxu0 0.0
    %345 = vmatprep.subr.mxu0 0.0
    %346 = vmatpush1.msra.mxu0 0.0
    %347 = vmatprep.subr.mxu0 0.0
    %348 = vmatpush1.msra.mxu0 0.0
    %349 = vmatprep.mubr.f32.mxu0 0.0
    %350 = vmatmul.mubr.f32.gmra.mrb[0].mxu0 %v283
    %v351 = vpop.f32.mrb[0].mxu0
    %v352 = vadd.f32 0.0, %v351
    %v353 = vpop.f32.mrb[0].mxu0
    %354 = vdwg.mxu0
    %v355 = vmul.f32 %v264, %v352
    %v356 = vld [vmem:[%s4] sm:$0xff]
    %v357 = vld [vmem:[%s4 + $0x8] sm:$0xff]
    %v358 = vld [vmem:[%s4 + $0x10] sm:$0xff]
    %v359 = vld [vmem:[%s4 + $0x18] sm:$0xff]
    %v360 = vld [vmem:[%s4 + $0x20] sm:$0xff]
    %v361 = vld [vmem:[%s4 + $0x28] sm:$0xff]
    %v362 = vld [vmem:[%s4 + $0x30] sm:$0xff]
    %v363 = vld [vmem:[%s4 + $0x38] sm:$0xff]
    %v364 = vld [vmem:[%s4 + $0x40] sm:$0xff]
    %v365 = vld [vmem:[%s4 + $0x48] sm:$0xff]
    %v366 = vld [vmem:[%s4 + $0x50] sm:$0xff]
    %v367 = vld [vmem:[%s4 + $0x58] sm:$0xff]
    %v368 = vld [vmem:[%s4 + $0x60] sm:$0xff]
    %v369 = vld [vmem:[%s4 + $0x68] sm:$0xff]
    %v370 = vld [vmem:[%s4 + $0x70] sm:$0xff]
    %v371 = vld [vmem:[%s4 + $0x78] sm:$0xff]
    %v372 = vld [vmem:[%s5] sm:$0xff]
    %v373 = vld [vmem:[%s5 + $0x8] sm:$0xff]
    %374 = vmatprep.subr.mxu0 0.0
    %375 = vmatpush1.msra.mxu0 %v372
    %376 = vmatprep.subr.mxu0 0.0
    %377 = vmatpush1.msra.mxu0 %v373
    %378 = vmatprep.subr.mxu0 0.0
    %379 = vmatpush1.msra.mxu0 0.0
    %380 = vmatprep.subr.mxu0 0.0
    %381 = vmatpush1.msra.mxu0 0.0
    %382 = vmatprep.subr.mxu0 0.0
    %383 = vmatpush1.msra.mxu0 0.0
    %384 = vmatprep.subr.mxu0 0.0
    %385 = vmatpush1.msra.mxu0 0.0
    %386 = vmatprep.subr.mxu0 0.0
    %387 = vmatpush1.msra.mxu0 0.0
    %388 = vmatprep.subr.mxu0 0.0
    %389 = vmatpush1.msra.mxu0 0.0
    %390 = vmatprep.subr.mxu0 0.0
    %391 = vmatpush1.msra.mxu0 0.0
    %392 = vmatprep.subr.mxu0 0.0
    %393 = vmatpush1.msra.mxu0 0.0
    %394 = vmatprep.subr.mxu0 0.0
    %395 = vmatpush1.msra.mxu0 0.0
    %396 = vmatprep.subr.mxu0 0.0
    %397 = vmatpush1.msra.mxu0 0.0
    %398 = vmatprep.subr.mxu0 0.0
    %399 = vmatpush1.msra.mxu0 0.0
    %400 = vmatprep.subr.mxu0 0.0
    %401 = vmatpush1.msra.mxu0 0.0
    %402 = vmatprep.subr.mxu0 0.0
    %403 = vmatpush1.msra.mxu0 0.0
    %404 = vmatprep.subr.mxu0 0.0
    %405 = vmatpush1.msra.mxu0 0.0
    %406 = vmatprep.subr.mxu0 0.0
    %407 = vmatpush1.msra.mxu0 0.0
    %408 = vmatprep.subr.mxu0 0.0
    %409 = vmatpush1.msra.mxu0 0.0
    %410 = vmatprep.subr.mxu0 0.0
    %411 = vmatpush1.msra.mxu0 0.0
    %412 = vmatprep.subr.mxu0 0.0
    %413 = vmatpush1.msra.mxu0 0.0
    %414 = vmatprep.subr.mxu0 0.0
    %415 = vmatpush1.msra.mxu0 0.0
    %416 = vmatprep.subr.mxu0 0.0
    %417 = vmatpush1.msra.mxu0 0.0
    %418 = vmatprep.subr.mxu0 0.0
    %419 = vmatpush1.msra.mxu0 0.0
    %420 = vmatprep.subr.mxu0 0.0
    %421 = vmatpush1.msra.mxu0 0.0
    %422 = vmatprep.subr.mxu0 0.0
    %423 = vmatpush1.msra.mxu0 0.0
    %424 = vmatprep.subr.mxu0 0.0
    %425 = vmatpush1.msra.mxu0 0.0
    %426 = vmatprep.subr.mxu0 0.0
    %427 = vmatpush1.msra.mxu0 0.0
    %428 = vmatprep.subr.mxu0 0.0
    %429 = vmatpush1.msra.mxu0 0.0
    %430 = vmatprep.subr.mxu0 0.0
    %431 = vmatpush1.msra.mxu0 0.0
    %432 = vmatprep.subr.mxu0 0.0
    %433 = vmatpush1.msra.mxu0 0.0
    %434 = vmatprep.subr.mxu0 0.0
    %435 = vmatpush1.msra.mxu0 0.0
    %436 = vmatprep.subr.mxu0 0.0
    %437 = vmatpush1.msra.mxu0 0.0
    %438 = vmatprep.mubr.f32.mxu0 0.0
    %439 = vmatmul.mubr.f32.gmra.mrb[0].mxu0 %v283
    %v440 = vpop.f32.mrb[0].mxu0
    %v441 = vadd.f32 0.0, %v440
    %v442 = vpop.f32.mrb[0].mxu0
    %443 = vdwg.mxu0
    %444 = vmatprep.subr.mxu0 0.0
    %445 = vmatpush1.msra.mxu0 %v356
    %446 = vmatprep.subr.mxu0 0.0
    %447 = vmatpush1.msra.mxu0 %v357
    %448 = vmatprep.subr.mxu0 0.0
    %449 = vmatpush1.msra.mxu0 %v358
    %450 = vmatprep.subr.mxu0 0.0
    %451 = vmatpush1.msra.mxu0 %v359
    %452 = vmatprep.subr.mxu0 0.0
    %453 = vmatpush1.msra.mxu0 %v360
    %454 = vmatprep.subr.mxu0 0.0
    %455 = vmatpush1.msra.mxu0 %v361
    %456 = vmatprep.subr.mxu0 0.0
    %457 = vmatpush1.msra.mxu0 %v362
    %458 = vmatprep.subr.mxu0 0.0
    %459 = vmatpush1.msra.mxu0 %v363
    %460 = vmatprep.subr.mxu0 0.0
    %461 = vmatpush1.msra.mxu0 %v364
    %462 = vmatprep.subr.mxu0 0.0
    %463 = vmatpush1.msra.mxu0 %v365
    %464 = vmatprep.subr.mxu0 0.0
    %465 = vmatpush1.msra.mxu0 %v366
    %466 = vmatprep.subr.mxu0 0.0
    %467 = vmatpush1.msra.mxu0 %v367
    %468 = vmatprep.subr.mxu0 0.0
    %469 = vmatpush1.msra.mxu0 %v368
    %470 = vmatprep.subr.mxu0 0.0
    %471 = vmatpush1.msra.mxu0 %v369
    %472 = vmatprep.subr.mxu0 0.0
    %473 = vmatpush1.msra.mxu0 %v370
    %474 = vmatprep.subr.mxu0 0.0
    %475 = vmatpush1.msra.mxu0 %v371
    %476 = vmatprep.subr.mxu0 0.0
    %477 = vmatpush1.msra.mxu0 0.0
    %478 = vmatprep.subr.mxu0 0.0
    %479 = vmatpush1.msra.mxu0 0.0
    %480 = vmatprep.subr.mxu0 0.0
    %481 = vmatpush1.msra.mxu0 0.0
    %482 = vmatprep.subr.mxu0 0.0
    %483 = vmatpush1.msra.mxu0 0.0
    %484 = vmatprep.subr.mxu0 0.0
    %485 = vmatpush1.msra.mxu0 0.0
    %486 = vmatprep.subr.mxu0 0.0
    %487 = vmatpush1.msra.mxu0 0.0
    %488 = vmatprep.subr.mxu0 0.0
    %489 = vmatpush1.msra.mxu0 0.0
    %490 = vmatprep.subr.mxu0 0.0
    %491 = vmatpush1.msra.mxu0 0.0
    %492 = vmatprep.subr.mxu0 0.0
    %493 = vmatpush1.msra.mxu0 0.0
    %494 = vmatprep.subr.mxu0 0.0
    %495 = vmatpush1.msra.mxu0 0.0
    %496 = vmatprep.subr.mxu0 0.0
    %497 = vmatpush1.msra.mxu0 0.0
    %498 = vmatprep.subr.mxu0 0.0
    %499 = vmatpush1.msra.mxu0 0.0
    %500 = vmatprep.subr.mxu0 0.0
    %501 = vmatpush1.msra.mxu0 0.0
    %502 = vmatprep.subr.mxu0 0.0
    %503 = vmatpush1.msra.mxu0 0.0
    %504 = vmatprep.subr.mxu0 0.0
    %505 = vmatpush1.msra.mxu0 0.0
    %506 = vmatprep.subr.mxu0 0.0
    %507 = vmatpush1.msra.mxu0 0.0
    %508 = vmatprep.mubr.f32.mxu0 0.0
    %509 = vmatmul.mubr.f32.gmra.mrb[0].mxu0 %v355
    %v510 = vpop.f32.mrb[0].mxu0
    %v511 = vadd.f32 %v441, %v510
    %v512 = vpop.f32.mrb[0].mxu0
    %513 = vdwg.mxu0
    %v514 = vmax.f32 %v511, 0.0
    %v515 = vadd.f32 %v514, %v34
    %v516 = vld [vmem:[%s6] sm:$0xff]
    %v517 = vld [vmem:[%s6 + $0x8] sm:$0xff]
    %v518 = vld [vmem:[%s6 + $0x10] sm:$0xff]
    %v519 = vld [vmem:[%s6 + $0x18] sm:$0xff]
    %v520 = vld [vmem:[%s7] sm:$0x1]
    %v522 = vlaneseq
    %v523 = vshrl.u32 %v522, 7
    %v524 = vsub.s32 0, %v523
    %v525 = vrot.slane %v520, %v524
    %v528 = vsel %vm39, %v515, 0
    %530 = vmatprep.subr.mxu0 0.0
    %531 = vmatpush1.msra.mxu0 %v516
    %532 = vmatprep.subr.mxu0 0.0
    %533 = vmatpush1.msra.mxu0 %v517
    %534 = vmatprep.subr.mxu0 0.0
    %535 = vmatpush1.msra.mxu0 %v518
    %536 = vmatprep.subr.mxu0 0.0
    %537 = vmatpush1.msra.mxu0 %v519
    %538 = vmatprep.subr.mxu0 0.0
    %539 = vmatpush1.msra.mxu0 0.0
    %540 = vmatprep.subr.mxu0 0.0
    %541 = vmatpush1.msra.mxu0 0.0
    %542 = vmatprep.subr.mxu0 0.0
    %543 = vmatpush1.msra.mxu0 0.0
    %544 = vmatprep.subr.mxu0 0.0
    %545 = vmatpush1.msra.mxu0 0.0
    %546 = vmatprep.subr.mxu0 0.0
    %547 = vmatpush1.msra.mxu0 0.0
    %548 = vmatprep.subr.mxu0 0.0
    %549 = vmatpush1.msra.mxu0 0.0
    %550 = vmatprep.subr.mxu0 0.0
    %551 = vmatpush1.msra.mxu0 0.0
    %552 = vmatprep.subr.mxu0 0.0
    %553 = vmatpush1.msra.mxu0 0.0
    %554 = vmatprep.subr.mxu0 0.0
    %555 = vmatpush1.msra.mxu0 0.0
    %556 = vmatprep.subr.mxu0 0.0
    %557 = vmatpush1.msra.mxu0 0.0
    %558 = vmatprep.subr.mxu0 0.0
    %559 = vmatpush1.msra.mxu0 0.0
    %560 = vmatprep.subr.mxu0 0.0
    %561 = vmatpush1.msra.mxu0 0.0
    %562 = vmatprep.subr.mxu0 0.0
    %563 = vmatpush1.msra.mxu0 0.0
    %564 = vmatprep.subr.mxu0 0.0
    %565 = vmatpush1.msra.mxu0 0.0
    %566 = vmatprep.subr.mxu0 0.0
    %567 = vmatpush1.msra.mxu0 0.0
    %568 = vmatprep.subr.mxu0 0.0
    %569 = vmatpush1.msra.mxu0 0.0
    %570 = vmatprep.subr.mxu0 0.0
    %571 = vmatpush1.msra.mxu0 0.0
    %572 = vmatprep.subr.mxu0 0.0
    %573 = vmatpush1.msra.mxu0 0.0
    %574 = vmatprep.subr.mxu0 0.0
    %575 = vmatpush1.msra.mxu0 0.0
    %576 = vmatprep.subr.mxu0 0.0
    %577 = vmatpush1.msra.mxu0 0.0
    %578 = vmatprep.subr.mxu0 0.0
    %579 = vmatpush1.msra.mxu0 0.0
    %580 = vmatprep.subr.mxu0 0.0
    %581 = vmatpush1.msra.mxu0 0.0
    %582 = vmatprep.subr.mxu0 0.0
    %583 = vmatpush1.msra.mxu0 0.0
    %584 = vmatprep.subr.mxu0 0.0
    %585 = vmatpush1.msra.mxu0 0.0
    %586 = vmatprep.subr.mxu0 0.0
    %587 = vmatpush1.msra.mxu0 0.0
    %588 = vmatprep.subr.mxu0 0.0
    %589 = vmatpush1.msra.mxu0 0.0
    %590 = vmatprep.subr.mxu0 0.0
    %591 = vmatpush1.msra.mxu0 0.0
    %592 = vmatprep.subr.mxu0 0.0
    %593 = vmatpush1.msra.mxu0 0.0
    %594 = vmatprep.mubr.f32.mxu0 0.0
    %595 = vmatmul.mubr.f32.gmra.mrb[0].mxu0 %v528
    %v596 = vpop.f32.mrb[0].mxu0
    %v597 = vadd.f32 %v525, %v596
    %v598 = vpop.f32.mrb[0].mxu0
    %599 = vdwg.mxu0
    %vm600 = vcmask 64512
    %601 = vst.msk [vmem:[#allocation2] sm:$0xff] %vm600, %v597
    // Predicated region
    $region34: #{classifier_forward.1} parent=1 // pred_check
      _
    $region35: #{classifier_forward.1} parent=1 // pred_check_branch
      %603 = sbr.rel (0) target = $region37
    $region36: #{classifier_forward.1} parent=1 // pred_region
      %s605 = ssub.s32 128, 128
      %606 = vsyncadd [#allocation3], %s605
      %s608 = sshll.u32 [#allocation2], 4
      %s609 = int_to_ptr.vmem [resolvable:$true] %s608
      %611 = dma.vmem_to_hbm [thread:$0]  %s609, 128, %s8, [#allocation3]
    $region37: #{classifier_forward.1} parent=1 // pred_fallthru
      _
    // Predicated region
    $region38: #{classifier_forward.1} parent=1 // pred_check
      _
    $region39: #{classifier_forward.1} parent=1 // pred_check_branch
      %613 = sbr.rel (0) target = $region41
    $region40: #{classifier_forward.1} parent=1 // pred_region
      %s615 = ssub.s32 128, 128
      %616 = vsyncadd [#allocation5], %s615
      %s618 = sshll.u32 [#allocation4], 4
      %s619 = int_to_ptr.vmem [resolvable:$true] %s618
      %621 = dma.vmem_to_hbm [thread:$0]  %s619, 128, %s9, [#allocation5]
    $region41: #{classifier_forward.1} parent=1 // pred_fallthru
      _
    // Predicated region
    $region42: #{classifier_forward.1} parent=1 // pred_check
      _
    $region43: #{classifier_forward.1} parent=1 // pred_check_branch
      %623 = sbr.rel (0) target = $region45
    $region44: #{classifier_forward.1} parent=1 // pred_region
      _
    $region45: #{classifier_forward.1} parent=1 // pred_fallthru
      _
    // Predicated region
    $region46: #{classifier_forward.1} parent=1 // pred_check
      _
    $region47: #{classifier_forward.1} parent=1 // pred_check_branch
      %625 = sbr.rel (0) target = $region49
    $region48: #{classifier_forward.1} parent=1 // pred_region
      %626 = dma.done [#allocation3], 128
    $region49: #{classifier_forward.1} parent=1 // pred_fallthru
      _
    // Predicated region
    $region50: #{classifier_forward.1} parent=1 // pred_check
      _
    $region51: #{classifier_forward.1} parent=1 // pred_check_branch
      %628 = sbr.rel (0) target = $region53
    $region52: #{classifier_forward.1} parent=1 // pred_region
      %629 = dma.done [#allocation5], 128
    $region53: #{classifier_forward.1} parent=1 // pred_fallthru
      _
    // Predicated region
    $region54: #{classifier_forward.1} parent=1 // pred_check
      _
    $region55: #{classifier_forward.1} parent=1 // pred_check_branch
      %631 = sbr.rel (0) target = $region57
    $region56: #{classifier_forward.1} parent=1 // pred_region
      _
    $region57: #{classifier_forward.1} parent=1 // pred_fallthru
      _
    %632 = vsyncpa [#allocation3], 1
    %633 = vsyncpa [#allocation5], 1

</llo_original>
